<compile_context>
chip_gen: v6e
topology: v6e:2x2x1
jax: 0.10.0
libtpu: 0.0.40
codegen_flags: <defaults>
</compile_context>

<pallas_src>
import jax
import jax.numpy as jnp
from jax.experimental import pallas as pl
from jax.experimental.pallas import tpu as pltpu


def _round_up(x: int, m: int) -> int:
    return (x + m - 1) // m * m


def _mlp_kernel(delta_ref, x_ref, w1_ref, b1_ref, w2_ref, b2_ref, w3_ref,
                b3_ref, o_ref):
    """Fused 3-layer MLP: (matmul+bias+relu) x2, matmul+bias+clamp.

    bf16 matmul operands, f32 accumulation (preferred_element_type), f32
    epilogue.  delta comes from SMEM so it is a runtime value, not a constant.
    """
    x = x_ref[...].astype(jnp.bfloat16)

    h1 = jnp.dot(x, w1_ref[...], preferred_element_type=jnp.float32) + b1_ref[...]
    h1 = jnp.maximum(h1, 0.0).astype(jnp.bfloat16)

    h2 = jnp.dot(h1, w2_ref[...], preferred_element_type=jnp.float32) + b2_ref[...]
    h2 = jnp.maximum(h2, 0.0).astype(jnp.bfloat16)

    out = jnp.dot(h2, w3_ref[...], preferred_element_type=jnp.float32) + b3_ref[...]
    # T.clamp(..., min=0, max=delta)
    o_ref[...] = jnp.clip(out, 0.0, delta_ref[0, 0])


def prepare_params(params):
    """One-time parameter preparation (call once per parameter update).

    Weights -> bf16 (MXU operands), biases -> f32 row vectors (epilogue).
    Keeping this out of net_forward avoids re-emitting cast passes per call.
    """
    w1, b1, w2, b2, w3, b3 = params
    return (w1.astype(jnp.bfloat16), b1.astype(jnp.float32).reshape(1, -1),
            w2.astype(jnp.bfloat16), b2.astype(jnp.float32).reshape(1, -1),
            w3.astype(jnp.bfloat16), b3.astype(jnp.float32).reshape(1, -1))


def net_forward(state, prepared_params, delta, *, block_b=2048):
    """state: (B, state_dim) f32. Returns clamp(MLP(state), 0, delta) as f32."""
    w1, b1, w2, b2, w3, b3 = prepared_params
    B, state_dim = state.shape
    hidden = w1.shape[1]
    assert hidden % 128 == 0, "hidden width must be a multiple of 128 lanes"

    # Batch tile: large by default, capped at ceil(B/2) (sublane aligned) so the
    # grid has >=2 steps whenever possible -> both v7x TensorCores get work.
    target = max(8, _round_up(pl.cdiv(B, 2), 8))
    bb = max(8, min(block_b, target))
    b_pad = _round_up(B, bb)
    grid = (b_pad // bb,)

    # Only row padding (no 128-lane feature padding) -- cheap or a no-op.
    x = state if b_pad == B else jnp.pad(state, ((0, b_pad - B), (0, 0)))

    # delta as an SMEM scalar: runtime value, no recompile when it changes.
    delta_arr = jnp.asarray(delta, jnp.float32).reshape(1, 1)

    out = pl.pallas_call(
        _mlp_kernel,
        out_shape=jax.ShapeDtypeStruct((b_pad, state_dim), jnp.float32),
        grid_spec=pltpu.PrefetchScalarGridSpec(
            num_scalar_prefetch=0,
            grid=grid,
            in_specs=[
                # delta scalar, whole (1,1) array resident in SMEM
                pl.BlockSpec(memory_space=pltpu.MemorySpace.SMEM),
                # activations tiled over batch; last dim == full array dim (32)
                pl.BlockSpec((bb, state_dim), lambda i: (i, 0)),
                # weights / biases: full arrays, same block every grid step
                pl.BlockSpec((state_dim, hidden), lambda i: (0, 0)),
                pl.BlockSpec((1, hidden),         lambda i: (0, 0)),
                pl.BlockSpec((hidden, hidden),    lambda i: (0, 0)),
                pl.BlockSpec((1, hidden),         lambda i: (0, 0)),
                pl.BlockSpec((hidden, state_dim), lambda i: (0, 0)),
                pl.BlockSpec((1, state_dim),      lambda i: (0, 0)),
            ],
            out_specs=pl.BlockSpec((bb, state_dim), lambda i: (i, 0)),
        ),
        compiler_params=pltpu.CompilerParams(
            dimension_semantics=("parallel",),
            vmem_limit_bytes=32 * 1024 * 1024,
        ),
    )(delta_arr, x, w1, b1, w2, b2, w3, b3)

    # Drop batch row padding (no column slice needed anymore).
    return out if b_pad == B else out[:B]


def init_params(key, state_dim, hidden=128):
    """PyTorch-style uniform(-1/sqrt(fan_in), 1/sqrt(fan_in)) init.

    Weights are stored transposed relative to nn.Linear: shape (in, out),
    so the kernel computes y = x @ W + b (== x @ W_torch.T + b).
    """
    def linear(key, fan_in, fan_out):
        kw, kb = jax.random.split(key)
        bound = 1.0 / jnp.sqrt(fan_in)
        w = jax.random.uniform(kw, (fan_in, fan_out), jnp.float32, -bound, bound)
        b = jax.random.uniform(kb, (1, fan_out), jnp.float32, -bound, bound)
        return w, b

    k1, k2, k3 = jax.random.split(key, 3)
    w1, b1 = linear(k1, state_dim, hidden)
    w2, b2 = linear(k2, hidden, hidden)
    w3, b3 = linear(k3, hidden, state_dim)
    return (w1, b1, w2, b2, w3, b3)


def reference_forward(state, params, delta):
    """Pure-JAX f32 reference matching the PyTorch forward."""
    w1, b1, w2, b2, w3, b3 = params
    x = jnp.maximum(state @ w1 + b1, 0.0)
    x = jnp.maximum(x @ w2 + b2, 0.0)
    return jnp.clip(x @ w3 + b3, 0.0, delta)


if __name__ == "__main__":
    key = jax.random.PRNGKey(0)
    k_params, k_state, k_state2 = jax.random.split(key, 3)

    state_dim = 32
    delta = 0.1  # args.delta
    params = init_params(k_params, state_dim, hidden=128)
    prepped = prepare_params(params)  # hoisted out of the hot path

    # Small batch: tile shrinks to the batch, single grid step.
    state = jax.random.normal(k_state, (8, state_dim), jnp.float32)
    out = jax.block_until_ready(net_forward(state, prepped, delta))
    ref = reference_forward(state, params, delta)
    assert out.shape == state.shape
    # bf16 matmul operands (f32 accumulation) -> slightly relaxed tolerance.
    assert jnp.allclose(out, ref, atol=2e-2, rtol=2e-2), \
        "mismatch vs reference (small batch)"

    # Ragged batch: exercises row padding + multi-step grid (>=2 steps so both
    # v7x TensorCores get work via the "parallel" grid axis).
    state2 = jax.random.normal(k_state2, (300, state_dim), jnp.float32)
    out2 = jax.block_until_ready(net_forward(state2, prepped, delta, block_b=128))
    ref2 = reference_forward(state2, params, delta)
    assert out2.shape == state2.shape
    assert jnp.allclose(out2, ref2, atol=2e-2, rtol=2e-2), \
        "mismatch vs reference (ragged batch)"

    # Runtime-delta path: changing delta must not change results semantics
    # (it is an SMEM input now, so no recompile either).
    out3 = jax.block_until_ready(net_forward(state2, prepped, 0.05, block_b=128))
    ref3 = reference_forward(state2, params, 0.05)
    assert jnp.allclose(out3, ref3, atol=2e-2, rtol=2e-2), \
        "mismatch vs reference (alternate delta)"

    print("KERNEL_OK")
</pallas_src>

<mosaic_0001>
module attributes {stable_mosaic.version = 11 : i64} {
  func.func @_mlp_kernel(%arg0: i32, %arg1: memref<1x1xf32, #tpu.memory_space<smem>>, %arg2: memref<8x32xf32, #tpu.memory_space<vmem>>, %arg3: memref<32x128xbf16, #tpu.memory_space<vmem>>, %arg4: memref<1x128xf32, #tpu.memory_space<vmem>>, %arg5: memref<128x128xbf16, #tpu.memory_space<vmem>>, %arg6: memref<1x128xf32, #tpu.memory_space<vmem>>, %arg7: memref<128x32xbf16, #tpu.memory_space<vmem>>, %arg8: memref<1x32xf32, #tpu.memory_space<vmem>>, %arg9: memref<8x32xf32, #tpu.memory_space<vmem>>) attributes {dimension_semantics = [#tpu.dimension_semantics<parallel>], iteration_bounds = array<i64: 1>, scalar_prefetch = 0 : i64, scratch_operands = 0 : i64, tpu.core_type = #tpu.core_type<tc>, window_params = [{transform_indices = @transform_0, window_bounds = array<i64: 1, 1>}, {transform_indices = @transform_1, window_bounds = array<i64: 8, 32>}, {pipeline_mode = #tpu.pipeline_mode<synchronous>, transform_indices = @transform_2, window_bounds = array<i64: 32, 128>}, {pipeline_mode = #tpu.pipeline_mode<synchronous>, transform_indices = @transform_3, window_bounds = array<i64: 1, 128>}, {pipeline_mode = #tpu.pipeline_mode<synchronous>, transform_indices = @transform_4, window_bounds = array<i64: 128, 128>}, {pipeline_mode = #tpu.pipeline_mode<synchronous>, transform_indices = @transform_5, window_bounds = array<i64: 1, 128>}, {pipeline_mode = #tpu.pipeline_mode<synchronous>, transform_indices = @transform_6, window_bounds = array<i64: 128, 32>}, {pipeline_mode = #tpu.pipeline_mode<synchronous>, transform_indices = @transform_7, window_bounds = array<i64: 1, 32>}, {transform_indices = @transform_8, window_bounds = array<i64: 8, 32>}]} {
    %c0 = arith.constant 0 : index
    %c0_0 = arith.constant 0 : index
    %0 = vector.load %arg2[%c0, %c0_0] : memref<8x32xf32, #tpu.memory_space<vmem>>, vector<8x32xf32>
    %1 = arith.truncf %0 : vector<8x32xf32> to vector<8x32xbf16>
    %c0_1 = arith.constant 0 : index
    %c0_2 = arith.constant 0 : index
    %2 = vector.load %arg3[%c0_1, %c0_2] : memref<32x128xbf16, #tpu.memory_space<vmem>>, vector<32x128xbf16>
    %cst = arith.constant dense<0.000000e+00> : vector<8x128xf32>
    %3 = tpu.matmul %1, %2, %cst {dimension_numbers = #tpu.dot_dimension_numbers<[1], [0], [0], [1], [0, 0, 1, 1], [], []>} : vector<8x32xbf16>, vector<32x128xbf16>, vector<8x128xf32> -> vector<8x128xf32>
    %c0_3 = arith.constant 0 : index
    %c0_4 = arith.constant 0 : index
    %4 = vector.load %arg4[%c0_3, %c0_4] : memref<1x128xf32, #tpu.memory_space<vmem>>, vector<1x128xf32>
    %5 = vector.broadcast %4 : vector<1x128xf32> to vector<8x128xf32>
    %6 = arith.addf %3, %5 : vector<8x128xf32>
    %cst_5 = arith.constant 0.000000e+00 : f32
    %7 = vector.broadcast %cst_5 : f32 to vector<8x128xf32>
    %8 = arith.maximumf %6, %7 : vector<8x128xf32>
    %9 = arith.truncf %8 : vector<8x128xf32> to vector<8x128xbf16>
    %c0_6 = arith.constant 0 : index
    %c0_7 = arith.constant 0 : index
    %10 = vector.load %arg5[%c0_6, %c0_7] : memref<128x128xbf16, #tpu.memory_space<vmem>>, vector<128x128xbf16>
    %cst_8 = arith.constant dense<0.000000e+00> : vector<8x128xf32>
    %11 = tpu.matmul %9, %10, %cst_8 {dimension_numbers = #tpu.dot_dimension_numbers<[1], [0], [0], [1], [0, 0, 1, 1], [], []>} : vector<8x128xbf16>, vector<128x128xbf16>, vector<8x128xf32> -> vector<8x128xf32>
    %c0_9 = arith.constant 0 : index
    %c0_10 = arith.constant 0 : index
    %12 = vector.load %arg6[%c0_9, %c0_10] : memref<1x128xf32, #tpu.memory_space<vmem>>, vector<1x128xf32>
    %13 = vector.broadcast %12 : vector<1x128xf32> to vector<8x128xf32>
    %14 = arith.addf %11, %13 : vector<8x128xf32>
    %cst_11 = arith.constant 0.000000e+00 : f32
    %15 = vector.broadcast %cst_11 : f32 to vector<8x128xf32>
    %16 = arith.maximumf %14, %15 : vector<8x128xf32>
    %17 = arith.truncf %16 : vector<8x128xf32> to vector<8x128xbf16>
    %c0_12 = arith.constant 0 : index
    %c0_13 = arith.constant 0 : index
    %18 = vector.load %arg7[%c0_12, %c0_13] : memref<128x32xbf16, #tpu.memory_space<vmem>>, vector<128x32xbf16>
    %cst_14 = arith.constant dense<0.000000e+00> : vector<8x32xf32>
    %19 = tpu.matmul %17, %18, %cst_14 {dimension_numbers = #tpu.dot_dimension_numbers<[1], [0], [0], [1], [0, 0, 1, 1], [], []>} : vector<8x128xbf16>, vector<128x32xbf16>, vector<8x32xf32> -> vector<8x32xf32>
    %c0_15 = arith.constant 0 : index
    %c0_16 = arith.constant 0 : index
    %20 = vector.load %arg8[%c0_15, %c0_16] : memref<1x32xf32, #tpu.memory_space<vmem>>, vector<1x32xf32>
    %21 = vector.broadcast %20 : vector<1x32xf32> to vector<8x32xf32>
    %22 = arith.addf %19, %21 : vector<8x32xf32>
    %c0_17 = arith.constant 0 : index
    %c0_18 = arith.constant 0 : index
    %23 = memref.load %arg1[%c0_17, %c0_18] : memref<1x1xf32, #tpu.memory_space<smem>>
    %cst_19 = arith.constant 0.000000e+00 : f32
    %24 = vector.broadcast %cst_19 : f32 to vector<8x32xf32>
    %25 = arith.maximumf %24, %22 : vector<8x32xf32>
    %26 = vector.broadcast %23 : f32 to vector<8x32xf32>
    %27 = arith.minimumf %26, %25 : vector<8x32xf32>
    %c0_20 = arith.constant 0 : index
    %c0_21 = arith.constant 0 : index
    %28 = vector.load %arg9[%c0_20, %c0_21] : memref<8x32xf32, #tpu.memory_space<vmem>>, vector<8x32xf32>
    tpu.vector_store %arg9[%c0_20, %c0_21], %27 {strides = array<i32>} : memref<8x32xf32, #tpu.memory_space<vmem>>, vector<8x32xf32>,
    return
  }
  func.func @transform_0(%arg0: i32) -> (i32, i32) {
    %c0_i32 = arith.constant 0 : i32
    %c0_i32_0 = arith.constant 0 : i32
    %c0_i32_1 = arith.constant 0 : i32
    return %c0_i32, %c0_i32_0 : i32, i32
  }
  func.func @transform_1(%arg0: i32) -> (i32, i32) {
    %c0_i32 = arith.constant 0 : i32
    %c0_i32_0 = arith.constant 0 : i32
    return %arg0, %c0_i32 : i32, i32
  }
  func.func @transform_2(%arg0: i32) -> (i32, i32) {
    %c0_i32 = arith.constant 0 : i32
    %c0_i32_0 = arith.constant 0 : i32
    %c0_i32_1 = arith.constant 0 : i32
    return %c0_i32, %c0_i32_0 : i32, i32
  }
  func.func @transform_3(%arg0: i32) -> (i32, i32) {
    %c0_i32 = arith.constant 0 : i32
    %c0_i32_0 = arith.constant 0 : i32
    %c0_i32_1 = arith.constant 0 : i32
    return %c0_i32, %c0_i32_0 : i32, i32
  }
  func.func @transform_4(%arg0: i32) -> (i32, i32) {
    %c0_i32 = arith.constant 0 : i32
    %c0_i32_0 = arith.constant 0 : i32
    %c0_i32_1 = arith.constant 0 : i32
    return %c0_i32, %c0_i32_0 : i32, i32
  }
  func.func @transform_5(%arg0: i32) -> (i32, i32) {
    %c0_i32 = arith.constant 0 : i32
    %c0_i32_0 = arith.constant 0 : i32
    %c0_i32_1 = arith.constant 0 : i32
    return %c0_i32, %c0_i32_0 : i32, i32
  }
  func.func @transform_6(%arg0: i32) -> (i32, i32) {
    %c0_i32 = arith.constant 0 : i32
    %c0_i32_0 = arith.constant 0 : i32
    %c0_i32_1 = arith.constant 0 : i32
    return %c0_i32, %c0_i32_0 : i32, i32
  }
  func.func @transform_7(%arg0: i32) -> (i32, i32) {
    %c0_i32 = arith.constant 0 : i32
    %c0_i32_0 = arith.constant 0 : i32
    %c0_i32_1 = arith.constant 0 : i32
    return %c0_i32, %c0_i32_0 : i32, i32
  }
  func.func @transform_8(%arg0: i32) -> (i32, i32) {
    %c0_i32 = arith.constant 0 : i32
    %c0_i32_0 = arith.constant 0 : i32
    return %arg0, %c0_i32 : i32, i32
  }
}

</mosaic_0001>

<llo_original>
// kernel: tpu_custom_call.1
$region0: #{tpu_custom_call.1}
  #allocation0 [shape = 'u32[]', space=smem, size = 0x4, offset = 0x4, fixed_abs, tag = 'smem constant byte address 0x4 - core index']
  #allocation1 [shape = 'u32[144,128]{1,0:T(1,128)}', space=vmem, size = 0x12000, scoped, tag = 'internal scratch']
  #allocation2 [shape = 'f32[1,1]{1,0:T(1,128)S(6)}', space=smem, size = 0x200, scoped, tag = 'scoped memory for tpu_custom_call.1']
  %s0 = inlined_call_operand.<no memory space> [shape: f32[1,1], index: 0, kind: input, shape index: {}]
  %s1 = inlined_call_operand.hbm [shape: f32[8,32], index: 1, kind: input, shape index: {}]
  %s2 = inlined_call_operand.vmem [shape: bf16[32,128], index: 2, kind: input, shape index: {}]
  %s3 = inlined_call_operand.vmem [shape: f32[1,128], index: 3, kind: input, shape index: {}]
  %s4 = inlined_call_operand.vmem [shape: bf16[128,128], index: 4, kind: input, shape index: {}]
  %s5 = inlined_call_operand.vmem [shape: f32[1,128], index: 5, kind: input, shape index: {}]
  %s6 = inlined_call_operand.vmem [shape: bf16[128,32], index: 6, kind: input, shape index: {}]
  %s7 = inlined_call_operand.vmem [shape: f32[1,32], index: 7, kind: input, shape index: {}]
  %s8 = inlined_call_operand.hbm [shape: f32[8,32], index: 8, kind: output, shape index: {}]
  %s9 = sld [smem:[#allocation0]]
  $region46: #{tpu_custom_call.1} parent=0
    _
  %s11 = ssub.s32 1, %s9
  %s12 = scalar_select 0, %s11, %s9
  %13 = sst [smem:[#allocation2]] %s0
  $region1: #{tpu_custom_call.1} parent=0
    #allocation3 [shape = 'u8[4096]{0}', space=vmem, size = 0x1000, scoped, tag = 'input window, operand 1, single buffered']
    #allocation4 [shape = 's32[1]{0}', space=sflag, size = 0x4, scoped, tag = 'scoped memory for tpu_custom_call.1']
    #allocation5 [shape = 's32[1]{0}', space=sflag, size = 0x4, scoped, tag = 'scoped memory for tpu_custom_call.1']
    #allocation6 [shape = 'u8[4096]{0}', space=vmem, size = 0x1000, scoped, tag = 'output window, operand 0, single buffered']
    %14 = vsyncpa [#allocation4], 0
    %15 = vsyncpa [#allocation5], 0
    // Predicated region
    $region2: #{tpu_custom_call.1} parent=1 // pred_check
      _
    $region3: #{tpu_custom_call.1} parent=1 // pred_check_branch
      %17 = sbr.rel (0) target = $region5
    $region4: #{tpu_custom_call.1} parent=1 // pred_region
      _
    $region5: #{tpu_custom_call.1} parent=1 // pred_fallthru
      _
    // Predicated region
    $region6: #{tpu_custom_call.1} parent=1 // pred_check
      _
    $region7: #{tpu_custom_call.1} parent=1 // pred_check_branch
      %19 = sbr.rel (0) target = $region9
    $region8: #{tpu_custom_call.1} parent=1 // pred_region
      %s21 = ssub.s32 128, 128
      %22 = vsyncadd [#allocation4], %s21
      %s24 = sshll.u32 [#allocation3], 4
      %s25 = int_to_ptr.vmem [resolvable:$true] %s24
      %27 = dma.hbm_to_vmem [thread:$0]  %s1, 128, %s25, [#allocation4]
    $region9: #{tpu_custom_call.1} parent=1 // pred_fallthru
      _
    // Predicated region
    $region10: #{tpu_custom_call.1} parent=1 // pred_check
      _
    $region11: #{tpu_custom_call.1} parent=1 // pred_check_branch
      %29 = sbr.rel (0) target = $region13
    $region12: #{tpu_custom_call.1} parent=1 // pred_region
      _
    $region13: #{tpu_custom_call.1} parent=1 // pred_fallthru
      _
    // Predicated region
    $region14: #{tpu_custom_call.1} parent=1 // pred_check
      _
    $region15: #{tpu_custom_call.1} parent=1 // pred_check_branch
      %31 = sbr.rel (0) target = $region17
    $region16: #{tpu_custom_call.1} parent=1 // pred_region
      _
    $region17: #{tpu_custom_call.1} parent=1 // pred_fallthru
      _
    // Predicated region
    $region18: #{tpu_custom_call.1} parent=1 // pred_check
      _
    $region19: #{tpu_custom_call.1} parent=1 // pred_check_branch
      %33 = sbr.rel (0) target = $region21
    $region20: #{tpu_custom_call.1} parent=1 // pred_region
      _
    $region21: #{tpu_custom_call.1} parent=1 // pred_fallthru
      _
    // Predicated region
    $region22: #{tpu_custom_call.1} parent=1 // pred_check
      _
    $region23: #{tpu_custom_call.1} parent=1 // pred_check_branch
      %35 = sbr.rel (0) target = $region25
    $region24: #{tpu_custom_call.1} parent=1 // pred_region
      _
    $region25: #{tpu_custom_call.1} parent=1 // pred_fallthru
      _
    // Predicated region
    $region26: #{tpu_custom_call.1} parent=1 // pred_check
      _
    $region27: #{tpu_custom_call.1} parent=1 // pred_check_branch
      %37 = sbr.rel (0) target = $region29
    $region28: #{tpu_custom_call.1} parent=1 // pred_region
      _
    $region29: #{tpu_custom_call.1} parent=1 // pred_fallthru
      _
    // Predicated region
    $region30: #{tpu_custom_call.1} parent=1 // pred_check
      _
    $region31: #{tpu_custom_call.1} parent=1 // pred_check_branch
      %39 = sbr.rel (0) target = $region33
    $region32: #{tpu_custom_call.1} parent=1 // pred_region
      _
    $region33: #{tpu_custom_call.1} parent=1 // pred_fallthru
      _
    // Predicated region
    $region34: #{tpu_custom_call.1} parent=1 // pred_check
      _
    $region35: #{tpu_custom_call.1} parent=1 // pred_check_branch
      %41 = sbr.rel (0) target = $region37
    $region36: #{tpu_custom_call.1} parent=1 // pred_region
      %42 = dma.done [#allocation4], 128
    $region37: #{tpu_custom_call.1} parent=1 // pred_fallthru
      _
    %v44 = vld [vmem:[#allocation3] sm:$0xff]
    %v45 = vpack.c.bf16 %v44, %v44
    %v46 = vld [vmem:[%s2] sm:$0xf]
    %v47 = vld [vmem:[%s2 + $0x4] sm:$0xf]
    %v48 = vld [vmem:[%s2 + $0x8] sm:$0xf]
    %v49 = vld [vmem:[%s2 + $0xc] sm:$0xf]
    %v50 = vld [vmem:[%s3] sm:$0x1]
    %v52 = vlaneseq
    %v53 = vshrl.u32 %v52, 7
    %v54 = vsub.s32 0, %v53
    %v55 = vrot.slane %v50, %v54
    %v61 = vunpack.c.l.b16 %v46
    %v62 = vunpack.c.l.b16 %v47
    %v63 = vunpack.c.l.b16 %v48
    %v64 = vunpack.c.l.b16 %v49
    %v65 = vpack.c.b16 %v62, %v61
    %v66 = vpack.c.b16 %v64, %v63
    %vm69 = vcmask 261120
    %v71 = vsel %vm69, %v45, 0
    %73 = vmatprep.subr.bf16.mxu0 0
    %74 = vmatpush1.bf16.msra.mxu0 0
    %75 = vmatprep.subr.bf16.mxu0 0
    %76 = vmatpush1.bf16.msra.mxu0 0
    %77 = vmatprep.subr.bf16.mxu0 0
    %78 = vmatpush1.bf16.msra.mxu0 0
    %79 = vmatprep.subr.bf16.mxu0 0
    %80 = vmatpush1.bf16.msra.mxu0 0
    %81 = vmatprep.subr.bf16.mxu0 0
    %82 = vmatpush1.bf16.msra.mxu0 0
    %83 = vmatprep.subr.bf16.mxu0 0
    %84 = vmatpush1.bf16.msra.mxu0 0
    %85 = vmatprep.subr.bf16.mxu0 0
    %86 = vmatpush1.bf16.msra.mxu0 %v66
    %87 = vmatprep.subr.bf16.mxu0 0
    %88 = vmatpush1.bf16.msra.mxu0 %v65
    %89 = vmatprep.subr.bf16.mxu0 0
    %90 = vmatpush2.bf16.msra.mxu0 0
    %91 = vmatprep.subr.bf16.mxu0 0
    %92 = vmatpush2.bf16.msra.mxu0 0
    %93 = vmatprep.subr.bf16.mxu0 0
    %94 = vmatpush2.bf16.msra.mxu0 0
    %95 = vmatprep.subr.bf16.mxu0 0
    %96 = vmatpush2.bf16.msra.mxu0 0
    %97 = vmatprep.subr.bf16.mxu0 0
    %98 = vmatpush2.bf16.msra.mxu0 0
    %99 = vmatprep.subr.bf16.mxu0 0
    %100 = vmatpush2.bf16.msra.mxu0 0
    %101 = vmatprep.subr.bf16.mxu0 0
    %102 = vmatpush2.bf16.msra.mxu0 0
    %103 = vmatprep.subr.bf16.mxu0 0
    %104 = vmatpush2.bf16.msra.mxu0 0
    %105 = vmatprep.mubr.bf16.mxu0 0
    %106 = vmatmul.mubr.bf16.gmra.mxu0 %v71
    %v107 = vpop.f32.mrf.mxu0
    %v108 = vadd.f32 %v55, %v107
    %v109 = vpop.f32.mrf.mxu0
    %v110 = vpop.f32.mrf.mxu0
    %v111 = vpop.f32.mrf.mxu0
    %112 = vdwg.mxu0
    %v113 = vmax.f32 %v108, 0.0
    %v114 = vpack.c.bf16 %v113, %v113
    %v115 = vld [vmem:[%s4] sm:$0xf]
    %v116 = vld [vmem:[%s4 + $0x4] sm:$0xf]
    %v117 = vld [vmem:[%s4 + $0x8] sm:$0xf]
    %v118 = vld [vmem:[%s4 + $0xc] sm:$0xf]
    %v119 = vld [vmem:[%s4 + $0x10] sm:$0xf]
    %v120 = vld [vmem:[%s4 + $0x14] sm:$0xf]
    %v121 = vld [vmem:[%s4 + $0x18] sm:$0xf]
    %v122 = vld [vmem:[%s4 + $0x1c] sm:$0xf]
    %v123 = vld [vmem:[%s4 + $0x20] sm:$0xf]
    %v124 = vld [vmem:[%s4 + $0x24] sm:$0xf]
    %v125 = vld [vmem:[%s4 + $0x28] sm:$0xf]
    %v126 = vld [vmem:[%s4 + $0x2c] sm:$0xf]
    %v127 = vld [vmem:[%s4 + $0x30] sm:$0xf]
    %v128 = vld [vmem:[%s4 + $0x34] sm:$0xf]
    %v129 = vld [vmem:[%s4 + $0x38] sm:$0xf]
    %v130 = vld [vmem:[%s4 + $0x3c] sm:$0xf]
    %v131 = vld [vmem:[%s5] sm:$0x1]
    %v133 = vlaneseq
    %v134 = vshrl.u32 %v133, 7
    %v135 = vsub.s32 0, %v134
    %v136 = vrot.slane %v131, %v135
    %v154 = vunpack.c.l.b16 %v115
    %v155 = vunpack.c.l.b16 %v116
    %v156 = vunpack.c.l.b16 %v117
    %v157 = vunpack.c.l.b16 %v118
    %v158 = vunpack.c.l.b16 %v119
    %v159 = vunpack.c.l.b16 %v120
    %v160 = vunpack.c.l.b16 %v121
    %v161 = vunpack.c.l.b16 %v122
    %v162 = vunpack.c.l.b16 %v123
    %v163 = vunpack.c.l.b16 %v124
    %v164 = vunpack.c.l.b16 %v125
    %v165 = vunpack.c.l.b16 %v126
    %v166 = vunpack.c.l.b16 %v127
    %v167 = vunpack.c.l.b16 %v128
    %v168 = vunpack.c.l.b16 %v129
    %v169 = vunpack.c.l.b16 %v130
    %v170 = vpack.c.b16 %v155, %v154
    %v171 = vpack.c.b16 %v157, %v156
    %v172 = vpack.c.b16 %v159, %v158
    %v173 = vpack.c.b16 %v161, %v160
    %v174 = vpack.c.b16 %v163, %v162
    %v175 = vpack.c.b16 %v165, %v164
    %v176 = vpack.c.b16 %v167, %v166
    %v177 = vpack.c.b16 %v169, %v168
    %186 = vmatprep.subr.bf16.mxu0 0
    %187 = vmatpush1.bf16.msra.mxu0 %v177
    %188 = vmatprep.subr.bf16.mxu0 0
    %189 = vmatpush1.bf16.msra.mxu0 %v176
    %190 = vmatprep.subr.bf16.mxu0 0
    %191 = vmatpush1.bf16.msra.mxu0 %v175
    %192 = vmatprep.subr.bf16.mxu0 0
    %193 = vmatpush1.bf16.msra.mxu0 %v174
    %194 = vmatprep.subr.bf16.mxu0 0
    %195 = vmatpush1.bf16.msra.mxu0 %v173
    %196 = vmatprep.subr.bf16.mxu0 0
    %197 = vmatpush1.bf16.msra.mxu0 %v172
    %198 = vmatprep.subr.bf16.mxu0 0
    %199 = vmatpush1.bf16.msra.mxu0 %v171
    %200 = vmatprep.subr.bf16.mxu0 0
    %201 = vmatpush1.bf16.msra.mxu0 %v170
    %202 = vmatprep.subr.bf16.mxu0 0
    %203 = vmatpush2.bf16.msra.mxu0 0
    %204 = vmatprep.subr.bf16.mxu0 0
    %205 = vmatpush2.bf16.msra.mxu0 0
    %206 = vmatprep.subr.bf16.mxu0 0
    %207 = vmatpush2.bf16.msra.mxu0 0
    %208 = vmatprep.subr.bf16.mxu0 0
    %209 = vmatpush2.bf16.msra.mxu0 0
    %210 = vmatprep.subr.bf16.mxu0 0
    %211 = vmatpush2.bf16.msra.mxu0 0
    %212 = vmatprep.subr.bf16.mxu0 0
    %213 = vmatpush2.bf16.msra.mxu0 0
    %214 = vmatprep.subr.bf16.mxu0 0
    %215 = vmatpush2.bf16.msra.mxu0 0
    %216 = vmatprep.subr.bf16.mxu0 0
    %217 = vmatpush2.bf16.msra.mxu0 0
    %218 = vmatprep.mubr.bf16.mxu0 0
    %219 = vmatmul.mubr.bf16.gmra.mxu0 %v114
    %v220 = vpop.f32.mrf.mxu0
    %v221 = vadd.f32 %v136, %v220
    %v222 = vpop.f32.mrf.mxu0
    %v223 = vpop.f32.mrf.mxu0
    %v224 = vpop.f32.mrf.mxu0
    %225 = vdwg.mxu0
    %v226 = vmax.f32 %v221, 0.0
    %v227 = vpack.c.bf16 %v226, %v226
    %v228 = vld [vmem:[%s6] sm:$0xf]
    %v229 = vld [vmem:[%s6 + $0x4] sm:$0xf]
    %v230 = vld [vmem:[%s6 + $0x8] sm:$0xf]
    %v231 = vld [vmem:[%s6 + $0xc] sm:$0xf]
    %v232 = vld [vmem:[%s6 + $0x10] sm:$0xf]
    %v233 = vld [vmem:[%s6 + $0x14] sm:$0xf]
    %v234 = vld [vmem:[%s6 + $0x18] sm:$0xf]
    %v235 = vld [vmem:[%s6 + $0x1c] sm:$0xf]
    %v236 = vld [vmem:[%s6 + $0x20] sm:$0xf]
    %v237 = vld [vmem:[%s6 + $0x24] sm:$0xf]
    %v238 = vld [vmem:[%s6 + $0x28] sm:$0xf]
    %v239 = vld [vmem:[%s6 + $0x2c] sm:$0xf]
    %v240 = vld [vmem:[%s6 + $0x30] sm:$0xf]
    %v241 = vld [vmem:[%s6 + $0x34] sm:$0xf]
    %v242 = vld [vmem:[%s6 + $0x38] sm:$0xf]
    %v243 = vld [vmem:[%s6 + $0x3c] sm:$0xf]
    %v244 = vld [vmem:[%s7] sm:$0x1]
    %v246 = vlaneseq
    %v247 = vshrl.u32 %v246, 7
    %v248 = vsub.s32 0, %v247
    %v249 = vrot.slane %v244, %v248
    %v267 = vunpack.c.l.b16 %v228
    %v268 = vunpack.c.l.b16 %v229
    %v269 = vunpack.c.l.b16 %v230
    %v270 = vunpack.c.l.b16 %v231
    %v271 = vunpack.c.l.b16 %v232
    %v272 = vunpack.c.l.b16 %v233
    %v273 = vunpack.c.l.b16 %v234
    %v274 = vunpack.c.l.b16 %v235
    %v275 = vunpack.c.l.b16 %v236
    %v276 = vunpack.c.l.b16 %v237
    %v277 = vunpack.c.l.b16 %v238
    %v278 = vunpack.c.l.b16 %v239
    %v279 = vunpack.c.l.b16 %v240
    %v280 = vunpack.c.l.b16 %v241
    %v281 = vunpack.c.l.b16 %v242
    %v282 = vunpack.c.l.b16 %v243
    %v283 = vpack.c.b16 %v268, %v267
    %v284 = vpack.c.b16 %v270, %v269
    %v285 = vpack.c.b16 %v272, %v271
    %v286 = vpack.c.b16 %v274, %v273
    %v287 = vpack.c.b16 %v276, %v275
    %v288 = vpack.c.b16 %v278, %v277
    %v289 = vpack.c.b16 %v280, %v279
    %v290 = vpack.c.b16 %v282, %v281
    %299 = vmatprep.subr.bf16.mxu0 0
    %300 = vmatpush1.bf16.msra.mxu0 %v290
    %301 = vmatprep.subr.bf16.mxu0 0
    %302 = vmatpush1.bf16.msra.mxu0 %v289
    %303 = vmatprep.subr.bf16.mxu0 0
    %304 = vmatpush1.bf16.msra.mxu0 %v288
    %305 = vmatprep.subr.bf16.mxu0 0
    %306 = vmatpush1.bf16.msra.mxu0 %v287
    %307 = vmatprep.subr.bf16.mxu0 0
    %308 = vmatpush1.bf16.msra.mxu0 %v286
    %309 = vmatprep.subr.bf16.mxu0 0
    %310 = vmatpush1.bf16.msra.mxu0 %v285
    %311 = vmatprep.subr.bf16.mxu0 0
    %312 = vmatpush1.bf16.msra.mxu0 %v284
    %313 = vmatprep.subr.bf16.mxu0 0
    %314 = vmatpush1.bf16.msra.mxu0 %v283
    %315 = vmatprep.subr.bf16.mxu0 0
    %316 = vmatpush2.bf16.msra.mxu0 0
    %317 = vmatprep.subr.bf16.mxu0 0
    %318 = vmatpush2.bf16.msra.mxu0 0
    %319 = vmatprep.subr.bf16.mxu0 0
    %320 = vmatpush2.bf16.msra.mxu0 0
    %321 = vmatprep.subr.bf16.mxu0 0
    %322 = vmatpush2.bf16.msra.mxu0 0
    %323 = vmatprep.subr.bf16.mxu0 0
    %324 = vmatpush2.bf16.msra.mxu0 0
    %325 = vmatprep.subr.bf16.mxu0 0
    %326 = vmatpush2.bf16.msra.mxu0 0
    %327 = vmatprep.subr.bf16.mxu0 0
    %328 = vmatpush2.bf16.msra.mxu0 0
    %329 = vmatprep.subr.bf16.mxu0 0
    %330 = vmatpush2.bf16.msra.mxu0 0
    %331 = vmatprep.mubr.bf16.mxu0 0
    %332 = vmatmul.mubr.bf16.gmra.mxu0 %v227
    %v333 = vpop.f32.mrf.mxu0
    %v334 = vadd.f32 %v249, %v333
    %v335 = vpop.f32.mrf.mxu0
    %v336 = vpop.f32.mrf.mxu0
    %v337 = vpop.f32.mrf.mxu0
    %338 = vdwg.mxu0
    %s339 = sld [smem:[#allocation2]]
    %v340 = vmax.f32 %v334, 0.0
    %v341 = vstv %s339
    %v342 = vmin.f32 %v341, %v340
    %343 = vst.msk [vmem:[#allocation6] sm:$0xff] %vm69, %v342
    // Predicated region
    $region38: #{tpu_custom_call.1} parent=1 // pred_check
      _
    $region39: #{tpu_custom_call.1} parent=1 // pred_check_branch
      %345 = sbr.rel (0) target = $region41
    $region40: #{tpu_custom_call.1} parent=1 // pred_region
      %s347 = ssub.s32 128, 128
      %348 = vsyncadd [#allocation5], %s347
      %s350 = sshll.u32 [#allocation6], 4
      %s351 = int_to_ptr.vmem [resolvable:$true] %s350
      %353 = dma.vmem_to_hbm [thread:$0]  %s351, 128, %s8, [#allocation5]
    $region41: #{tpu_custom_call.1} parent=1 // pred_fallthru
      _
    // Predicated region
    $region42: #{tpu_custom_call.1} parent=1 // pred_check
      _
    $region43: #{tpu_custom_call.1} parent=1 // pred_check_branch
      %355 = sbr.rel (0) target = $region45
    $region44: #{tpu_custom_call.1} parent=1 // pred_region
      %356 = dma.done [#allocation5], 128
    $region45: #{tpu_custom_call.1} parent=1 // pred_fallthru
      _
    %357 = vsyncpa [#allocation4], 1
    %358 = vsyncpa [#allocation5], 1

</llo_original>
